<compile_context>
chip_gen: v5e
topology: v5e:2x2
jax: 0.10.0
libtpu: 0.0.40
codegen_flags: <defaults>
</compile_context>

<pallas_src>
import jax
import jax.numpy as jnp
from jax.experimental import pallas as pl
from jax.experimental.pallas import tpu as pltpu


def _discriminator_kernel(x_ref, w1_ref, b1_ref, w2_ref, b2_ref, o_ref):
    """One batch tile.

    x_ref : (4, T)  f32 VMEM   -- 4 input features, batch tile T in lanes
    w1_ref: (4, 3)  f32 SMEM
    b1_ref: (3,)    f32 SMEM
    w2_ref: (3,)    f32 SMEM
    b2_ref: (1,)    f32 SMEM
    o_ref : (1, T)  f32 VMEM   -- lane-dense output tile
    """
    # Per-feature (1, T) rows, loaded once.
    xs = [x_ref[k:k + 1, :] for k in range(4)]

    acc = None
    for j in range(3):                      # 3 hidden units, pure VPU FMAs (no MXU)
        h = xs[0] * w1_ref[0, j]
        for k in range(1, 4):
            h = h + xs[k] * w1_ref[k, j]
        h = h + b1_ref[j]
        # sigmoid(h) = 1 / (1 + exp(-h)): exp + approx reciprocal both on EUP.
        h = pl.reciprocal(1.0 + jnp.exp(-h), approx=True)
        t = h * w2_ref[j]                   # second Linear: 3 scalar FMAs
        acc = t if acc is None else acc + t

    y = acc + b2_ref[0]
    o_ref[...] = pl.reciprocal(1.0 + jnp.exp(-y), approx=True)


def discriminator_forward(x, w1, b1, w2, b2, *, tile_b=512):
    """x: (B, 4) f32 -> (B, 1) f32.  Weights stored as (in, out) like x @ W + b."""
    B = x.shape[0]
    # Lane-dense batch tile: multiple of 128, no bigger than needed for small B.
    tile_b = min(tile_b, max(128, ((B + 127) // 128) * 128))
    assert tile_b % 128 == 0
    Bp = ((B + tile_b - 1) // tile_b) * tile_b
    num_tiles = Bp // tile_b

    # Layout plumbing in the wrapper: batch -> lanes, pad ragged tail with zeros
    # (padded rows produce finite garbage through the sigmoids and are sliced off).
    xT = jnp.pad(x.T, ((0, 0), (0, Bp - B)))          # (4, Bp)

    smem = pl.BlockSpec(memory_space=pltpu.MemorySpace.SMEM)
    yT = pl.pallas_call(
        _discriminator_kernel,
        out_shape=jax.ShapeDtypeStruct((1, Bp), jnp.float32),
        grid=(num_tiles,),
        in_specs=[
            pl.BlockSpec((4, tile_b), lambda i: (0, i)),   # x tile (double-buffered)
            smem,                                          # w1 (4, 3) resident
            smem,                                          # b1 (3,)
            smem,                                          # w2 (3,)
            smem,                                          # b2 (1,)
        ],
        out_specs=pl.BlockSpec((1, tile_b), lambda i: (0, i)),
        compiler_params=pltpu.CompilerParams(
            dimension_semantics=("parallel",)),            # megacore on v7x
    )(xT, w1, b1, w2, b2)

    return yT[:, :B].T                                     # (B, 1)


def init_params(key):
    """Deterministic init mimicking torch.nn.Linear default (U[-1/sqrt(fan_in), +])."""
    k1, k2, k3, k4 = jax.random.split(key, 4)
    bound1 = 1.0 / jnp.sqrt(4.0)
    bound2 = 1.0 / jnp.sqrt(3.0)
    w1 = jax.random.uniform(k1, (4, 3), jnp.float32, -bound1, bound1)
    b1 = jax.random.uniform(k2, (3,), jnp.float32, -bound1, bound1)
    w2 = jax.random.uniform(k3, (3,), jnp.float32, -bound2, bound2)
    b2 = jax.random.uniform(k4, (1,), jnp.float32, -bound2, bound2)
    return w1, b1, w2, b2


def reference_forward(x, w1, b1, w2, b2):
    h = jax.nn.sigmoid(x @ w1 + b1)                        # (B, 3)
    return jax.nn.sigmoid(h @ w2.reshape(3, 1) + b2)       # (B, 1)


if __name__ == "__main__":
    key = jax.random.PRNGKey(0)
    kx, kp = jax.random.split(key)

    # Small example input consistent with the module: batch=8, 4 features.
    # (For B this small a standalone Pallas call is overhead-dominated; the
    #  kernel is meant for large-batch sweeps, but it is correct at any B.)
    x = jax.random.normal(kx, (8, 4), dtype=jnp.float32)
    w1, b1, w2, b2 = init_params(kp)

    fwd = jax.jit(discriminator_forward)
    out = jax.block_until_ready(fwd(x, w1, b1, w2, b2))

    ref = reference_forward(x, w1, b1, w2, b2)
    assert out.shape == (8, 1)
    # Loose-ish atol: in-kernel sigmoid uses the EUP approximate reciprocal.
    assert jnp.allclose(out, ref, atol=2e-2, rtol=0.0), (out, ref)

    print("KERNEL_OK")
</pallas_src>

<mosaic_0001>
module attributes {stable_mosaic.version = 11 : i64} {
  func.func @_discriminator_kernel(%arg0: i32, %arg1: memref<4x128xf32, #tpu.memory_space<vmem>>, %arg2: memref<4x3xf32, #tpu.memory_space<smem>>, %arg3: memref<3xf32, #tpu.memory_space<smem>>, %arg4: memref<3xf32, #tpu.memory_space<smem>>, %arg5: memref<1xf32, #tpu.memory_space<smem>>, %arg6: memref<1x128xf32, #tpu.memory_space<vmem>>) attributes {dimension_semantics = [#tpu.dimension_semantics<parallel>], iteration_bounds = array<i64: 1>, scalar_prefetch = 0 : i64, scratch_operands = 0 : i64, tpu.core_type = #tpu.core_type<tc>, window_params = [{transform_indices = @transform_0, window_bounds = array<i64: 4, 128>}, {transform_indices = @transform_1, window_bounds = array<i64: 4, 3>}, {transform_indices = @transform_2, window_bounds = array<i64: 3>}, {transform_indices = @transform_3, window_bounds = array<i64: 3>}, {transform_indices = @transform_4, window_bounds = array<i64: 1>}, {transform_indices = @transform_5, window_bounds = array<i64: 1, 128>}]} {
    %c0 = arith.constant 0 : index
    %c0_0 = arith.constant 0 : index
    %0 = vector.load %arg1[%c0, %c0_0] : memref<4x128xf32, #tpu.memory_space<vmem>>, vector<1x128xf32>
    %c1 = arith.constant 1 : index
    %c0_1 = arith.constant 0 : index
    %1 = vector.load %arg1[%c1, %c0_1] : memref<4x128xf32, #tpu.memory_space<vmem>>, vector<1x128xf32>
    %c2 = arith.constant 2 : index
    %c0_2 = arith.constant 0 : index
    %2 = vector.load %arg1[%c2, %c0_2] : memref<4x128xf32, #tpu.memory_space<vmem>>, vector<1x128xf32>
    %c3 = arith.constant 3 : index
    %c0_3 = arith.constant 0 : index
    %3 = vector.load %arg1[%c3, %c0_3] : memref<4x128xf32, #tpu.memory_space<vmem>>, vector<1x128xf32>
    %c0_4 = arith.constant 0 : index
    %c0_5 = arith.constant 0 : index
    %4 = memref.load %arg2[%c0_4, %c0_5] : memref<4x3xf32, #tpu.memory_space<smem>>
    %5 = vector.broadcast %4 : f32 to vector<1x128xf32>
    %6 = arith.mulf %0, %5 : vector<1x128xf32>
    %c1_6 = arith.constant 1 : index
    %c0_7 = arith.constant 0 : index
    %7 = memref.load %arg2[%c1_6, %c0_7] : memref<4x3xf32, #tpu.memory_space<smem>>
    %8 = vector.broadcast %7 : f32 to vector<1x128xf32>
    %9 = arith.mulf %1, %8 : vector<1x128xf32>
    %10 = arith.addf %6, %9 : vector<1x128xf32>
    %c2_8 = arith.constant 2 : index
    %c0_9 = arith.constant 0 : index
    %11 = memref.load %arg2[%c2_8, %c0_9] : memref<4x3xf32, #tpu.memory_space<smem>>
    %12 = vector.broadcast %11 : f32 to vector<1x128xf32>
    %13 = arith.mulf %2, %12 : vector<1x128xf32>
    %14 = arith.addf %10, %13 : vector<1x128xf32>
    %c3_10 = arith.constant 3 : index
    %c0_11 = arith.constant 0 : index
    %15 = memref.load %arg2[%c3_10, %c0_11] : memref<4x3xf32, #tpu.memory_space<smem>>
    %16 = vector.broadcast %15 : f32 to vector<1x128xf32>
    %17 = arith.mulf %3, %16 : vector<1x128xf32>
    %18 = arith.addf %14, %17 : vector<1x128xf32>
    %c0_12 = arith.constant 0 : index
    %19 = memref.load %arg3[%c0_12] : memref<3xf32, #tpu.memory_space<smem>>
    %20 = vector.broadcast %19 : f32 to vector<1x128xf32>
    %21 = arith.addf %18, %20 : vector<1x128xf32>
    %cst = arith.constant 0.000000e+00 : f32
    %22 = vector.broadcast %cst : f32 to vector<1x128xf32>
    %23 = arith.subf %22, %21 : vector<1x128xf32>
    %24 = math.exp %23 : vector<1x128xf32>
    %cst_13 = arith.constant 1.000000e+00 : f32
    %25 = vector.broadcast %cst_13 : f32 to vector<1x128xf32>
    %26 = arith.addf %25, %24 : vector<1x128xf32>
    %27 = tpu.reciprocal %26 {approx = true} : vector<1x128xf32> -> vector<1x128xf32>
    %c0_14 = arith.constant 0 : index
    %28 = memref.load %arg4[%c0_14] : memref<3xf32, #tpu.memory_space<smem>>
    %29 = vector.broadcast %28 : f32 to vector<1x128xf32>
    %30 = arith.mulf %27, %29 : vector<1x128xf32>
    %c0_15 = arith.constant 0 : index
    %c1_16 = arith.constant 1 : index
    %31 = memref.load %arg2[%c0_15, %c1_16] : memref<4x3xf32, #tpu.memory_space<smem>>
    %32 = vector.broadcast %31 : f32 to vector<1x128xf32>
    %33 = arith.mulf %0, %32 : vector<1x128xf32>
    %c1_17 = arith.constant 1 : index
    %c1_18 = arith.constant 1 : index
    %34 = memref.load %arg2[%c1_17, %c1_18] : memref<4x3xf32, #tpu.memory_space<smem>>
    %35 = vector.broadcast %34 : f32 to vector<1x128xf32>
    %36 = arith.mulf %1, %35 : vector<1x128xf32>
    %37 = arith.addf %33, %36 : vector<1x128xf32>
    %c2_19 = arith.constant 2 : index
    %c1_20 = arith.constant 1 : index
    %38 = memref.load %arg2[%c2_19, %c1_20] : memref<4x3xf32, #tpu.memory_space<smem>>
    %39 = vector.broadcast %38 : f32 to vector<1x128xf32>
    %40 = arith.mulf %2, %39 : vector<1x128xf32>
    %41 = arith.addf %37, %40 : vector<1x128xf32>
    %c3_21 = arith.constant 3 : index
    %c1_22 = arith.constant 1 : index
    %42 = memref.load %arg2[%c3_21, %c1_22] : memref<4x3xf32, #tpu.memory_space<smem>>
    %43 = vector.broadcast %42 : f32 to vector<1x128xf32>
    %44 = arith.mulf %3, %43 : vector<1x128xf32>
    %45 = arith.addf %41, %44 : vector<1x128xf32>
    %c1_23 = arith.constant 1 : index
    %46 = memref.load %arg3[%c1_23] : memref<3xf32, #tpu.memory_space<smem>>
    %47 = vector.broadcast %46 : f32 to vector<1x128xf32>
    %48 = arith.addf %45, %47 : vector<1x128xf32>
    %cst_24 = arith.constant 0.000000e+00 : f32
    %49 = vector.broadcast %cst_24 : f32 to vector<1x128xf32>
    %50 = arith.subf %49, %48 : vector<1x128xf32>
    %51 = math.exp %50 : vector<1x128xf32>
    %cst_25 = arith.constant 1.000000e+00 : f32
    %52 = vector.broadcast %cst_25 : f32 to vector<1x128xf32>
    %53 = arith.addf %52, %51 : vector<1x128xf32>
    %54 = tpu.reciprocal %53 {approx = true} : vector<1x128xf32> -> vector<1x128xf32>
    %c1_26 = arith.constant 1 : index
    %55 = memref.load %arg4[%c1_26] : memref<3xf32, #tpu.memory_space<smem>>
    %56 = vector.broadcast %55 : f32 to vector<1x128xf32>
    %57 = arith.mulf %54, %56 : vector<1x128xf32>
    %58 = arith.addf %30, %57 : vector<1x128xf32>
    %c0_27 = arith.constant 0 : index
    %c2_28 = arith.constant 2 : index
    %59 = memref.load %arg2[%c0_27, %c2_28] : memref<4x3xf32, #tpu.memory_space<smem>>
    %60 = vector.broadcast %59 : f32 to vector<1x128xf32>
    %61 = arith.mulf %0, %60 : vector<1x128xf32>
    %c1_29 = arith.constant 1 : index
    %c2_30 = arith.constant 2 : index
    %62 = memref.load %arg2[%c1_29, %c2_30] : memref<4x3xf32, #tpu.memory_space<smem>>
    %63 = vector.broadcast %62 : f32 to vector<1x128xf32>
    %64 = arith.mulf %1, %63 : vector<1x128xf32>
    %65 = arith.addf %61, %64 : vector<1x128xf32>
    %c2_31 = arith.constant 2 : index
    %c2_32 = arith.constant 2 : index
    %66 = memref.load %arg2[%c2_31, %c2_32] : memref<4x3xf32, #tpu.memory_space<smem>>
    %67 = vector.broadcast %66 : f32 to vector<1x128xf32>
    %68 = arith.mulf %2, %67 : vector<1x128xf32>
    %69 = arith.addf %65, %68 : vector<1x128xf32>
    %c3_33 = arith.constant 3 : index
    %c2_34 = arith.constant 2 : index
    %70 = memref.load %arg2[%c3_33, %c2_34] : memref<4x3xf32, #tpu.memory_space<smem>>
    %71 = vector.broadcast %70 : f32 to vector<1x128xf32>
    %72 = arith.mulf %3, %71 : vector<1x128xf32>
    %73 = arith.addf %69, %72 : vector<1x128xf32>
    %c2_35 = arith.constant 2 : index
    %74 = memref.load %arg3[%c2_35] : memref<3xf32, #tpu.memory_space<smem>>
    %75 = vector.broadcast %74 : f32 to vector<1x128xf32>
    %76 = arith.addf %73, %75 : vector<1x128xf32>
    %cst_36 = arith.constant 0.000000e+00 : f32
    %77 = vector.broadcast %cst_36 : f32 to vector<1x128xf32>
    %78 = arith.subf %77, %76 : vector<1x128xf32>
    %79 = math.exp %78 : vector<1x128xf32>
    %cst_37 = arith.constant 1.000000e+00 : f32
    %80 = vector.broadcast %cst_37 : f32 to vector<1x128xf32>
    %81 = arith.addf %80, %79 : vector<1x128xf32>
    %82 = tpu.reciprocal %81 {approx = true} : vector<1x128xf32> -> vector<1x128xf32>
    %c2_38 = arith.constant 2 : index
    %83 = memref.load %arg4[%c2_38] : memref<3xf32, #tpu.memory_space<smem>>
    %84 = vector.broadcast %83 : f32 to vector<1x128xf32>
    %85 = arith.mulf %82, %84 : vector<1x128xf32>
    %86 = arith.addf %58, %85 : vector<1x128xf32>
    %c0_39 = arith.constant 0 : index
    %87 = memref.load %arg5[%c0_39] : memref<1xf32, #tpu.memory_space<smem>>
    %88 = vector.broadcast %87 : f32 to vector<1x128xf32>
    %89 = arith.addf %86, %88 : vector<1x128xf32>
    %cst_40 = arith.constant 0.000000e+00 : f32
    %90 = vector.broadcast %cst_40 : f32 to vector<1x128xf32>
    %91 = arith.subf %90, %89 : vector<1x128xf32>
    %92 = math.exp %91 : vector<1x128xf32>
    %cst_41 = arith.constant 1.000000e+00 : f32
    %93 = vector.broadcast %cst_41 : f32 to vector<1x128xf32>
    %94 = arith.addf %93, %92 : vector<1x128xf32>
    %95 = tpu.reciprocal %94 {approx = true} : vector<1x128xf32> -> vector<1x128xf32>
    %c0_42 = arith.constant 0 : index
    %c0_43 = arith.constant 0 : index
    %96 = vector.load %arg6[%c0_42, %c0_43] : memref<1x128xf32, #tpu.memory_space<vmem>>, vector<1x128xf32>
    tpu.vector_store %arg6[%c0_42, %c0_43], %95 {strides = array<i32>} : memref<1x128xf32, #tpu.memory_space<vmem>>, vector<1x128xf32>,
    return
  }
  func.func @transform_0(%arg0: i32) -> (i32, i32) {
    %c0_i32 = arith.constant 0 : i32
    %c0_i32_0 = arith.constant 0 : i32
    return %c0_i32, %arg0 : i32, i32
  }
  func.func @transform_1(%arg0: i32) -> (i32, i32) {
    %c0_i32 = arith.constant 0 : i32
    %c0_i32_0 = arith.constant 0 : i32
    %c0_i32_1 = arith.constant 0 : i32
    return %c0_i32, %c0_i32_0 : i32, i32
  }
  func.func @transform_2(%arg0: i32) -> i32 {
    %c0_i32 = arith.constant 0 : i32
    %c0_i32_0 = arith.constant 0 : i32
    return %c0_i32 : i32
  }
  func.func @transform_3(%arg0: i32) -> i32 {
    %c0_i32 = arith.constant 0 : i32
    %c0_i32_0 = arith.constant 0 : i32
    return %c0_i32 : i32
  }
  func.func @transform_4(%arg0: i32) -> i32 {
    %c0_i32 = arith.constant 0 : i32
    %c0_i32_0 = arith.constant 0 : i32
    return %c0_i32 : i32
  }
  func.func @transform_5(%arg0: i32) -> (i32, i32) {
    %c0_i32 = arith.constant 0 : i32
    %c0_i32_0 = arith.constant 0 : i32
    return %c0_i32, %arg0 : i32, i32
  }
}

</mosaic_0001>

<llo_original>
// kernel: discriminator_forward.1
$region0: #{discriminator_forward.1}
  #allocation0 [shape = 'u32[]', space=smem, size = 0x4, offset = 0x4, fixed_abs, tag = 'smem constant byte address 0x4 - core index']
  #allocation1 [shape = 'u32[72,128]{1,0:T(1,128)}', space=vmem, size = 0x9000, scoped, tag = 'internal scratch']
  #allocation2 [shape = 'f32[1]{0:T(128)S(6)}', space=smem, size = 0x200, scoped, tag = 'scoped memory for discriminator_forward.1']
  %s0 = inlined_call_operand.vmem [shape: f32[4,128], index: 0, kind: input, shape index: {}]
  %s1 = inlined_call_operand.vmem [shape: f32[4,3], index: 1, kind: input, shape index: {}]
  %s2 = inlined_call_operand.vmem [shape: f32[3], index: 2, kind: input, shape index: {}]
  %s3 = inlined_call_operand.vmem [shape: f32[3], index: 3, kind: input, shape index: {}]
  %s4 = inlined_call_operand.<no memory space> [shape: f32[1], index: 4, kind: input, shape index: {}]
  %s5 = inlined_call_operand.vmem [shape: f32[1,128], index: 5, kind: output, shape index: {}]
  %s6 = sld [smem:[#allocation0]]
  $region42: #{discriminator_forward.1} parent=0
    _
  %s8 = ssub.s32 1, %s6
  %s9 = scalar_select 0, %s8, %s6
  %10 = sst [smem:[#allocation2]] %s4
  $region1: #{discriminator_forward.1} parent=0
    #allocation3 [shape = 'u8[2048]{0}', space=smem, size = 0x800, scoped, tag = 'input window, operand 1, single buffered']
    #allocation4 [shape = 's32[1]{0}', space=sflag, size = 0x4, scoped, tag = 'scoped memory for discriminator_forward.1']
    #allocation5 [shape = 'u8[512]{0}', space=smem, size = 0x200, scoped, tag = 'input window, operand 2, single buffered']
    #allocation6 [shape = 's32[1]{0}', space=sflag, size = 0x4, scoped, tag = 'scoped memory for discriminator_forward.1']
    #allocation7 [shape = 'u8[512]{0}', space=smem, size = 0x200, scoped, tag = 'input window, operand 3, single buffered']
    %11 = vsyncpa [#allocation4], 0
    %12 = vsyncpa [#allocation6], 0
    // Predicated region
    $region2: #{discriminator_forward.1} parent=1 // pred_check
      _
    $region3: #{discriminator_forward.1} parent=1 // pred_check_branch
      %14 = sbr.rel (0) target = $region5
    $region4: #{discriminator_forward.1} parent=1 // pred_region
      _
    $region5: #{discriminator_forward.1} parent=1 // pred_fallthru
      _
    // Predicated region
    $region6: #{discriminator_forward.1} parent=1 // pred_check
      _
    $region7: #{discriminator_forward.1} parent=1 // pred_check_branch
      %16 = sbr.rel (0) target = $region9
    $region8: #{discriminator_forward.1} parent=1 // pred_region
      %18 = vsyncadd [#allocation4], 0
      %s20 = sshll.u32 %s1, 4
      %s21 = int_to_ptr.vmem [resolvable:$true] %s20
      %23 = dma.vmem_to_smem %s21, 64, [#allocation3], [#allocation4]
    $region9: #{discriminator_forward.1} parent=1 // pred_fallthru
      _
    // Predicated region
    $region10: #{discriminator_forward.1} parent=1 // pred_check
      _
    $region11: #{discriminator_forward.1} parent=1 // pred_check_branch
      %25 = sbr.rel (0) target = $region13
    $region12: #{discriminator_forward.1} parent=1 // pred_region
      %27 = vsyncadd [#allocation6], 0
      %s29 = sshll.u32 %s2, 4
      %s30 = int_to_ptr.vmem [resolvable:$true] %s29
      %32 = dma.vmem_to_smem %s30, 16, [#allocation5], [#allocation6]
    $region13: #{discriminator_forward.1} parent=1 // pred_fallthru
      _
    // Predicated region
    $region14: #{discriminator_forward.1} parent=1 // pred_check
      _
    $region15: #{discriminator_forward.1} parent=1 // pred_check_branch
      %34 = sbr.rel (0) target = $region17
    $region16: #{discriminator_forward.1} parent=1 // pred_region
      %36 = vsyncadd [#allocation6], 0
      %s38 = sshll.u32 %s3, 4
      %s39 = int_to_ptr.vmem [resolvable:$true] %s38
      %41 = dma.vmem_to_smem %s39, 16, [#allocation7], [#allocation6]
    $region17: #{discriminator_forward.1} parent=1 // pred_fallthru
      _
    // Predicated region
    $region18: #{discriminator_forward.1} parent=1 // pred_check
      _
    $region19: #{discriminator_forward.1} parent=1 // pred_check_branch
      %43 = sbr.rel (0) target = $region21
    $region20: #{discriminator_forward.1} parent=1 // pred_region
      _
    $region21: #{discriminator_forward.1} parent=1 // pred_fallthru
      _
    // Predicated region
    $region22: #{discriminator_forward.1} parent=1 // pred_check
      _
    $region23: #{discriminator_forward.1} parent=1 // pred_check_branch
      %45 = sbr.rel (0) target = $region25
    $region24: #{discriminator_forward.1} parent=1 // pred_region
      %47 = dma.done [#allocation4], 64
    $region25: #{discriminator_forward.1} parent=1 // pred_fallthru
      _
    // Predicated region
    $region26: #{discriminator_forward.1} parent=1 // pred_check
      _
    $region27: #{discriminator_forward.1} parent=1 // pred_check_branch
      %49 = sbr.rel (0) target = $region29
    $region28: #{discriminator_forward.1} parent=1 // pred_region
      %51 = dma.done [#allocation6], 16
    $region29: #{discriminator_forward.1} parent=1 // pred_fallthru
      _
    // Predicated region
    $region30: #{discriminator_forward.1} parent=1 // pred_check
      _
    $region31: #{discriminator_forward.1} parent=1 // pred_check_branch
      %53 = sbr.rel (0) target = $region33
    $region32: #{discriminator_forward.1} parent=1 // pred_region
      %55 = dma.done [#allocation6], 16
    $region33: #{discriminator_forward.1} parent=1 // pred_fallthru
      _
    %56 = sfence
    %v57 = vld [vmem:[%s0] sm:$0x1]
    %v58 = vld [vmem:[%s0 + $0x1] sm:$0x1]
    %v59 = vld [vmem:[%s0 + $0x2] sm:$0x1]
    %v60 = vld [vmem:[%s0 + $0x3] sm:$0x1]
    %s61 = sld [smem:[#allocation3]]
    %v62 = vstv %s61
    %v63 = vmul.f32 %v57, %v62
    %s64 = sld [smem:[#allocation3 + $0x80]]
    %v65 = vstv %s64
    %v66 = vmul.f32 %v58, %v65
    %v67 = vadd.f32 %v63, %v66
    %s68 = sld [smem:[#allocation3 + $0x100]]
    %v69 = vstv %s68
    %v70 = vmul.f32 %v59, %v69
    %v71 = vadd.f32 %v67, %v70
    %s72 = sld [smem:[#allocation3 + $0x180]]
    %v73 = vstv %s72
    %v74 = vmul.f32 %v60, %v73
    %v75 = vadd.f32 %v71, %v74
    %s76 = sld [smem:[#allocation5]]
    %v77 = vstv %s76
    %v78 = vadd.f32 %v75, %v77
    %v79 = vsub.f32 0.0, %v78
    %v80 = vmul.f32 %v79, 1.442695
    %v81 = vpow.pop %v80
    %v82 = vadd.f32 %v81, 1.0
    %v83 = vrcp.pop %v82
    %s84 = sld [smem:[#allocation7]]
    %v85 = vstv %s84
    %v86 = vmul.f32 %v83, %v85
    %s87 = sld [smem:[#allocation3 + $0x1]]
    %v88 = vstv %s87
    %v89 = vmul.f32 %v57, %v88
    %s90 = sld [smem:[#allocation3 + $0x81]]
    %v91 = vstv %s90
    %v92 = vmul.f32 %v58, %v91
    %v93 = vadd.f32 %v89, %v92
    %s94 = sld [smem:[#allocation3 + $0x101]]
    %v95 = vstv %s94
    %v96 = vmul.f32 %v59, %v95
    %v97 = vadd.f32 %v93, %v96
    %s98 = sld [smem:[#allocation3 + $0x181]]
    %v99 = vstv %s98
    %v100 = vmul.f32 %v60, %v99
    %v101 = vadd.f32 %v97, %v100
    %s102 = sld [smem:[#allocation5 + $0x1]]
    %v103 = vstv %s102
    %v104 = vadd.f32 %v101, %v103
    %v105 = vsub.f32 0.0, %v104
    %v106 = vmul.f32 %v105, 1.442695
    %v107 = vpow.pop %v106
    %v108 = vadd.f32 %v107, 1.0
    %v109 = vrcp.pop %v108
    %s110 = sld [smem:[#allocation7 + $0x1]]
    %v111 = vstv %s110
    %v112 = vmul.f32 %v109, %v111
    %v113 = vadd.f32 %v86, %v112
    %s114 = sld [smem:[#allocation3 + $0x2]]
    %v115 = vstv %s114
    %v116 = vmul.f32 %v57, %v115
    %s117 = sld [smem:[#allocation3 + $0x82]]
    %v118 = vstv %s117
    %v119 = vmul.f32 %v58, %v118
    %v120 = vadd.f32 %v116, %v119
    %s121 = sld [smem:[#allocation3 + $0x102]]
    %v122 = vstv %s121
    %v123 = vmul.f32 %v59, %v122
    %v124 = vadd.f32 %v120, %v123
    %s125 = sld [smem:[#allocation3 + $0x182]]
    %v126 = vstv %s125
    %v127 = vmul.f32 %v60, %v126
    %v128 = vadd.f32 %v124, %v127
    %s129 = sld [smem:[#allocation5 + $0x2]]
    %v130 = vstv %s129
    %v131 = vadd.f32 %v128, %v130
    %v132 = vsub.f32 0.0, %v131
    %v133 = vmul.f32 %v132, 1.442695
    %v134 = vpow.pop %v133
    %v135 = vadd.f32 %v134, 1.0
    %v136 = vrcp.pop %v135
    %s137 = sld [smem:[#allocation7 + $0x2]]
    %v138 = vstv %s137
    %v139 = vmul.f32 %v136, %v138
    %v140 = vadd.f32 %v113, %v139
    %s141 = sld [smem:[#allocation2]]
    %v142 = vstv %s141
    %v143 = vadd.f32 %v140, %v142
    %v144 = vsub.f32 0.0, %v143
    %v145 = vmul.f32 %v144, 1.442695
    %v146 = vpow.pop %v145
    %v147 = vadd.f32 %v146, 1.0
    %v148 = vrcp.pop %v147
    %149 = vst [vmem:[%s5] sm:$0x1] %v148
    // Predicated region
    $region34: #{discriminator_forward.1} parent=1 // pred_check
      _
    $region35: #{discriminator_forward.1} parent=1 // pred_check_branch
      %151 = sbr.rel (0) target = $region37
    $region36: #{discriminator_forward.1} parent=1 // pred_region
      _
    $region37: #{discriminator_forward.1} parent=1 // pred_fallthru
      _
    // Predicated region
    $region38: #{discriminator_forward.1} parent=1 // pred_check
      _
    $region39: #{discriminator_forward.1} parent=1 // pred_check_branch
      %153 = sbr.rel (0) target = $region41
    $region40: #{discriminator_forward.1} parent=1 // pred_region
      _
    $region41: #{discriminator_forward.1} parent=1 // pred_fallthru
      _
    %154 = vsyncpa [#allocation4], 1
    %155 = vsyncpa [#allocation6], 1

</llo_original>
